<compile_context>
chip_gen: v7x
topology: tpu7x:2x2x1
jax: 0.10.0
libtpu: 0.0.40
codegen_flags: <defaults>
</compile_context>

<pallas_src>
import functools

import jax
import jax.numpy as jnp
from jax.experimental import pallas as pl
from jax.experimental.pallas import tpu as pltpu


def _rup(x, m):
    return ((x + m - 1) // m) * m


def _cparams(dim_sem, est_vmem_bytes):
    # Explicit scoped-VMEM budget (floor at 32 MiB); keeps tiling portable
    # across the 64 MiB (v7x) vs 128 MiB (v5e/v6e) generations.
    return pltpu.CompilerParams(
        dimension_semantics=dim_sem,
        vmem_limit_bytes=int(max(est_vmem_bytes, 32 * 1024 * 1024)))


# ---------------------------------------------------------------------------
# im2col glue for the dense convs (stem 7x7 and all 1x1 convs; for 1x1 convs
# this degenerates to a reshape / strided slice — no patch blowup).
# ---------------------------------------------------------------------------
def im2col(x, kh, kw, stride, padding):
    N, H, W, C = x.shape
    OH = (H + 2 * padding - kh) // stride + 1
    OW = (W + 2 * padding - kw) // stride + 1
    xp = jnp.pad(x, ((0, 0), (padding, padding), (padding, padding), (0, 0)))
    cols = []
    for di in range(kh):
        for dj in range(kw):
            cols.append(xp[:, di:di + stride * OH:stride,
                           dj:dj + stride * OW:stride, :])
    patches = jnp.concatenate(cols, axis=-1)      # (N, OH, OW, kh*kw*C)
    return patches, OH, OW


# ---------------------------------------------------------------------------
# Kernel 1: tiled matmul (bf16 x bf16 -> f32 acc) + bias + optional fused
# residual add + optional ReLU.  Used for every dense conv (im2col), the LSTM
# input projection and the final Linear.
# ---------------------------------------------------------------------------
def _matmul_kernel(a_ref, b_ref, bias_ref, *rest, relu, has_res):
    if has_res:
        res_ref, o_ref, acc_ref = rest
    else:
        o_ref, acc_ref = rest
    k = pl.program_id(2)

    @pl.when(k == 0)
    def _():
        acc_ref[...] = jnp.zeros_like(acc_ref)

    acc_ref[...] += jnp.dot(a_ref[...], b_ref[...],
                            preferred_element_type=jnp.float32)

    @pl.when(k == pl.num_programs(2) - 1)
    def _():
        out = acc_ref[...] + bias_ref[...]
        if has_res:
            out = out + res_ref[...].astype(jnp.float32)
        if relu:
            out = jnp.maximum(out, 0.0)
        o_ref[...] = out.astype(o_ref.dtype)


@functools.partial(jax.jit, static_argnames=("relu", "out_dtype"))
def matmul_bias_act(a, b, bias, residual=None, *, relu=False,
                    out_dtype=jnp.float32):
    M, K = a.shape
    _, N = b.shape
    # Small-M (weight-bandwidth-bound) matmuls take wide tn/tk so the weight
    # panel is covered in few grid steps; large-M uses MXU-native 256 tiles.
    if M <= 256:
        tm = _rup(M, 8)
        tn = min(512, _rup(N, 128))
        tk = min(2048, _rup(K, 128))
    else:
        tm = 256
        tn = min(256, _rup(N, 128))
        tk = min(512, _rup(K, 128))
    Mp, Kp, Np = _rup(M, tm), _rup(K, tk), _rup(N, tn)

    a = a.astype(jnp.bfloat16)
    b = b.astype(jnp.bfloat16)
    if (Mp, Kp) != (M, K):
        a = jnp.pad(a, ((0, Mp - M), (0, Kp - K)))
    if (Kp, Np) != (K, N):
        b = jnp.pad(b, ((0, Kp - K), (0, Np - N)))
    bias_p = bias.reshape(1, N).astype(jnp.float32)
    if Np != N:
        bias_p = jnp.pad(bias_p, ((0, 0), (0, Np - N)))

    in_specs = [pl.BlockSpec((tm, tk), lambda i, j, k: (i, k)),
                pl.BlockSpec((tk, tn), lambda i, j, k: (k, j)),
                pl.BlockSpec((1, tn), lambda i, j, k: (0, j))]
    operands = [a, b, bias_p]
    has_res = residual is not None
    est = (2 * (tm * tk * 2 + tk * tn * 2 + tn * 4)
           + tm * tn * 4 + 2 * tm * tn * jnp.dtype(out_dtype).itemsize)
    if has_res:
        r = residual                                   # keep its own dtype
        if (Mp, Np) != (M, N):
            r = jnp.pad(r, ((0, Mp - M), (0, Np - N)))
        in_specs.append(pl.BlockSpec((tm, tn), lambda i, j, k: (i, j)))
        operands.append(r)
        est += 2 * tm * tn * r.dtype.itemsize
    est += 2 * 1024 * 1024

    grid = (Mp // tm, Np // tn, Kp // tk)
    out = pl.pallas_call(
        functools.partial(_matmul_kernel, relu=relu, has_res=has_res),
        out_shape=jax.ShapeDtypeStruct((Mp, Np), out_dtype),
        grid_spec=pltpu.PrefetchScalarGridSpec(
            num_scalar_prefetch=0,
            grid=grid,
            in_specs=in_specs,
            out_specs=pl.BlockSpec((tm, tn), lambda i, j, k: (i, j)),
            scratch_shapes=[pltpu.VMEM((tm, tn), jnp.float32)]),
        compiler_params=_cparams(("parallel", "parallel", "arbitrary"), est),
    )(*operands)
    if (Mp, Np) != (M, N):
        out = out[:M, :N]
    return out


# ---------------------------------------------------------------------------
# Kernels 2a/2b: fused 3x3 grouped convolution (groups=32).
# Groups are packed into 128-wide channel chunks; each chunk has a
# block-diagonal (9*128, 128) weight, so the output lane dim is 128-dense.
# im2col is fused: the padded (stride 1) or parity-split (stride 2) input is
# read once per chunk and the 9 taps are accumulated in f32 inside the kernel.
# ---------------------------------------------------------------------------
def _gconv_s1_kernel(x_ref, w_ref, b_ref, o_ref, *, relu):
    _, OH, OW, C = o_ref.shape
    acc = jnp.zeros((OH * OW, C), jnp.float32)
    for di in range(3):
        for dj in range(3):
            t = di * 3 + dj
            xs = x_ref[0, di:di + OH, dj:dj + OW, :].reshape(OH * OW, C)
            wt = w_ref[0, t * C:(t + 1) * C, :]
            acc = acc + jnp.dot(xs, wt, preferred_element_type=jnp.float32)
    out = acc + b_ref[0]
    if relu:
        out = jnp.maximum(out, 0.0)
    o_ref[0] = out.reshape(OH, OW, C).astype(o_ref.dtype)


def _gconv_s2_kernel(ee_ref, eo_ref, oe_ref, oo_ref, w_ref, b_ref, o_ref,
                     *, relu):
    _, OH, OW, C = o_ref.shape
    plane_refs = (ee_ref, eo_ref, oe_ref, oo_ref)
    acc = jnp.zeros((OH * OW, C), jnp.float32)
    for di in range(3):
        for dj in range(3):
            t = di * 3 + dj
            p_ref = plane_refs[(di & 1) * 2 + (dj & 1)]
            r0, c0 = di >> 1, dj >> 1
            xs = p_ref[0, r0:r0 + OH, c0:c0 + OW, :].reshape(OH * OW, C)
            wt = w_ref[0, t * C:(t + 1) * C, :]
            acc = acc + jnp.dot(xs, wt, preferred_element_type=jnp.float32)
    out = acc + b_ref[0]
    if relu:
        out = jnp.maximum(out, 0.0)
    o_ref[0] = out.reshape(OH, OW, C).astype(o_ref.dtype)


@functools.partial(jax.jit, static_argnames=("stride", "relu"))
def grouped_conv_bn(x, w_sg, bias_sg, *, stride, relu=True):
    # x: (N,H,W,C) bf16; w_sg: (C//128, 9*128, 128) bf16; bias_sg: (C//128,1,128)
    N, H, W, C = x.shape
    SG, KW, CB = w_sg.shape
    OH = (H - 1) // stride + 1
    OW = (W - 1) // stride + 1
    xp = jnp.pad(x.astype(jnp.bfloat16), ((0, 0), (1, 1), (1, 1), (0, 0)))
    if stride == 1:
        planes = [xp]
        kernel = functools.partial(_gconv_s1_kernel, relu=relu)
    else:
        # Row/col parity split of the padded input: each of the 9 taps becomes
        # a contiguous (OH, OW) window of one parity plane (no strided reads).
        planes = [xp[:, 0::2, 0::2, :], xp[:, 0::2, 1::2, :],
                  xp[:, 1::2, 0::2, :], xp[:, 1::2, 1::2, :]]
        kernel = functools.partial(_gconv_s2_kernel, relu=relu)

    in_specs = [pl.BlockSpec((1, p.shape[1], p.shape[2], CB),
                             lambda s, n: (n, 0, 0, s)) for p in planes]
    in_specs += [pl.BlockSpec((1, KW, CB), lambda s, n: (s, 0, 0)),
                 pl.BlockSpec((1, 1, CB), lambda s, n: (s, 0, 0))]

    in_bytes = sum(p.shape[1] * p.shape[2] * CB * 2 for p in planes)
    est = (2 * in_bytes + 2 * KW * CB * 2 + 2 * OH * OW * CB * 2
           + 6 * OH * OW * CB * 4 + 2 * 1024 * 1024)

    # Grid is (chunk, image) so the weight chunk stays resident across images.
    out = pl.pallas_call(
        kernel,
        out_shape=jax.ShapeDtypeStruct((N, OH, OW, C), jnp.bfloat16),
        grid_spec=pltpu.PrefetchScalarGridSpec(
            num_scalar_prefetch=0,
            grid=(SG, N),
            in_specs=in_specs,
            out_specs=pl.BlockSpec((1, OH, OW, CB),
                                   lambda s, n: (n, 0, 0, s))),
        compiler_params=_cparams(("parallel", "parallel"), est),
    )(*planes, w_sg, bias_sg)
    return out


# ---------------------------------------------------------------------------
# Kernel 3: 3x3 stride-2 pad-1 max-pool over the 4 parity planes, in bf16.
# ---------------------------------------------------------------------------
def _maxpool_kernel(ee_ref, eo_ref, oe_ref, oo_ref, o_ref):
    oh, ow = o_ref.shape[1], o_ref.shape[2]
    ee = ee_ref[0]
    eo = eo_ref[0]
    oe = oe_ref[0]
    oo = oo_ref[0]
    m = ee[:oh, :ow]
    m = jnp.maximum(m, ee[:oh, 1:ow + 1])
    m = jnp.maximum(m, ee[1:oh + 1, :ow])
    m = jnp.maximum(m, ee[1:oh + 1, 1:ow + 1])
    m = jnp.maximum(m, eo[:oh, :ow])
    m = jnp.maximum(m, eo[1:oh + 1, :ow])
    m = jnp.maximum(m, oe[:oh, :ow])
    m = jnp.maximum(m, oe[:oh, 1:ow + 1])
    m = jnp.maximum(m, oo[:oh, :ow])
    o_ref[0] = m.astype(o_ref.dtype)


@jax.jit
def maxpool_3x3_s2_p1(x):
    # TODO(synk): C=64 leaves lanes half-masked; lane-folding (W-pairing) or
    # fusing the pool into the stem epilogue is a further (small) win.
    N, H, W, C = x.shape
    OH = (H - 1) // 2 + 1
    OW = (W - 1) // 2 + 1
    # Input is post-ReLU (>= 0), so zero padding is exact for max-pool.
    xp = jnp.pad(x, ((0, 0), (1, 1), (1, 1), (0, 0)))
    planes = (xp[:, 0::2, 0::2, :], xp[:, 0::2, 1::2, :],
              xp[:, 1::2, 0::2, :], xp[:, 1::2, 1::2, :])
    est = (2 * sum(p.shape[1] * p.shape[2] * C * 2 for p in planes)
           + 2 * OH * OW * C * 2 + 2 * 1024 * 1024)
    return pl.pallas_call(
        _maxpool_kernel,
        out_shape=jax.ShapeDtypeStruct((N, OH, OW, C), x.dtype),
        grid_spec=pltpu.PrefetchScalarGridSpec(
            num_scalar_prefetch=0,
            grid=(N,),
            in_specs=[pl.BlockSpec((1,) + p.shape[1:],
                                   lambda i: (i, 0, 0, 0)) for p in planes],
            out_specs=pl.BlockSpec((1, OH, OW, C), lambda i: (i, 0, 0, 0))),
        compiler_params=_cparams(("parallel",), est),
    )(*planes)


# ---------------------------------------------------------------------------
# Kernel 4: spatial mean (AdaptiveAvgPool2d(1)), per image, f32 accumulation.
# ---------------------------------------------------------------------------
def _mean_kernel(x_ref, o_ref):
    o_ref[0] = jnp.mean(x_ref[0].astype(jnp.float32), axis=0, keepdims=True)


@jax.jit
def mean_spatial(x):                               # x: (N, HW, C)
    n, hw, c = x.shape
    est = 2 * hw * c * x.dtype.itemsize + 2 * c * 4 + 2 * 1024 * 1024
    out = pl.pallas_call(
        _mean_kernel,
        out_shape=jax.ShapeDtypeStruct((n, 1, c), jnp.float32),
        grid_spec=pltpu.PrefetchScalarGridSpec(
            num_scalar_prefetch=0,
            grid=(n,),
            in_specs=[pl.BlockSpec((1, hw, c), lambda i: (i, 0, 0))],
            out_specs=pl.BlockSpec((1, 1, c), lambda i: (i, 0, 0))),
        compiler_params=_cparams(("parallel",), est),
    )(x)
    return out.reshape(n, c)


# ---------------------------------------------------------------------------
# Kernel 5: LSTM recurrence.  W_hh is copied HBM->VMEM once (t==0) and stays
# resident for all time steps; h/c live in VMEM scratch; per step the kernel
# does x_proj + h @ W_hh (bf16 MXU, f32 acc), gates, and the state update.
# PyTorch gate order [i, f, g, o]; nn.LSTM here has bias=False (the module
# passes `bidirectional` into the `bias` slot).
# ---------------------------------------------------------------------------
def _lstm_kernel(xp_ref, whh_hbm, out_ref, whh_vmem, sem, h_scr, c_scr,
                 *, hidden):
    t = pl.program_id(0)

    @pl.when(t == 0)
    def _():
        h_scr[...] = jnp.zeros_like(h_scr)
        c_scr[...] = jnp.zeros_like(c_scr)
        cp = pltpu.make_async_copy(whh_hbm, whh_vmem, sem)
        cp.start()
        cp.wait()

    g = xp_ref[0] + jnp.dot(h_scr[...].astype(jnp.bfloat16), whh_vmem[...],
                            preferred_element_type=jnp.float32)
    i_g = jax.nn.sigmoid(g[:, 0 * hidden:1 * hidden])
    f_g = jax.nn.sigmoid(g[:, 1 * hidden:2 * hidden])
    c_g = jnp.tanh(g[:, 2 * hidden:3 * hidden])
    o_g = jax.nn.sigmoid(g[:, 3 * hidden:4 * hidden])
    c_new = f_g * c_scr[...] + i_g * c_g
    h_new = o_g * jnp.tanh(c_new)
    c_scr[...] = c_new
    h_scr[...] = h_new
    out_ref[0] = h_new


@jax.jit
def lstm_forward(xproj, whh_t):
    # xproj: (T, NB, 4H) f32 = x @ W_ih^T (no bias); whh_t: (H, 4H) bf16.
    # TODO(synk): on v7x the sequential recurrence runs on one TensorCore; a
    # core_map split of the gate axis would use the second core.
    T, NB, G4 = xproj.shape
    H = G4 // 4
    whh_t = whh_t.astype(jnp.bfloat16)
    est = (whh_t.size * 2 + 4 * NB * G4 * 4 + 8 * NB * H * 4
           + 4 * 1024 * 1024)
    return pl.pallas_call(
        functools.partial(_lstm_kernel, hidden=H),
        out_shape=jax.ShapeDtypeStruct((T, NB, H), jnp.float32),
        grid_spec=pltpu.PrefetchScalarGridSpec(
            num_scalar_prefetch=0,
            grid=(T,),
            in_specs=[pl.BlockSpec((1, NB, G4), lambda t: (t, 0, 0)),
                      pl.BlockSpec(memory_space=pl.ANY)],
            out_specs=pl.BlockSpec((1, NB, H), lambda t: (t, 0, 0)),
            scratch_shapes=[pltpu.VMEM((H, G4), jnp.bfloat16),
                            pltpu.SemaphoreType.DMA,
                            pltpu.VMEM((NB, H), jnp.float32),
                            pltpu.VMEM((NB, H), jnp.float32)]),
        compiler_params=_cparams(("arbitrary",), est),
    )(xproj, whh_t)


# ---------------------------------------------------------------------------
# Dense conv wrapper (stem 7x7 and all 1x1 convs) via im2col + matmul kernel.
# ---------------------------------------------------------------------------
@functools.partial(jax.jit, static_argnames=("stride", "padding", "relu"))
def conv_bn(x, w, bias, residual=None, *, stride, padding, relu):
    kh, kw, cin, cout = w.shape
    patches, OH, OW = im2col(x, kh, kw, stride, padding)
    N = x.shape[0]
    a = patches.reshape(N * OH * OW, kh * kw * cin)
    res = None if residual is None else residual.reshape(N * OH * OW, cout)
    y = matmul_bias_act(a, w.reshape(kh * kw * cin, cout), bias, res,
                        relu=relu, out_dtype=jnp.bfloat16)
    return y.reshape(N, OH, OW, cout)


# ---------------------------------------------------------------------------
# Parameter construction (deterministic, synthetic — no checkpoint loading).
# ---------------------------------------------------------------------------
def make_conv_bn_params(key, ksize, cin, cout, eps=1e-5):
    fan_in = ksize * ksize * cin
    std = (2.0 / fan_in) ** 0.5
    w = jax.random.normal(key, (ksize, ksize, cin, cout), jnp.float32) * std
    # TODO(synk): BatchNorm folded with eval-mode running stats (gamma=1,
    # beta=0, mean=0, var=1); train-mode batch statistics are not reproduced.
    scale = 1.0 / jnp.sqrt(1.0 + eps)
    return (w * scale).astype(jnp.bfloat16), jnp.zeros((cout,), jnp.float32)


def make_grouped_conv_bn_params(key, cin, cout, groups, eps=1e-5):
    # Packs Gb = 128//cout_g groups per 128-wide chunk into a block-diagonal
    # (9*128, 128) weight per chunk (row order: tap-major, then channel).
    cin_g, cout_g = cin // groups, cout // groups
    fan_in = 9 * cin_g
    std = (2.0 / fan_in) ** 0.5
    w = jax.random.normal(key, (groups, 3, 3, cin_g, cout_g), jnp.float32) * std
    w = w * (1.0 / jnp.sqrt(1.0 + eps))            # folded eval-mode BN
    SG = cout // 128
    Gb = 128 // cout_g
    wr = w.reshape(SG, Gb, 3, 3, cin_g, cout_g)
    wd = jnp.einsum('sgtuab,gh->stugahb', wr, jnp.eye(Gb, dtype=wr.dtype))
    wd = wd.reshape(SG, 9 * 128, 128).astype(jnp.bfloat16)
    return wd, jnp.zeros((SG, 1, 128), jnp.float32)


def make_backbone_params(key):
    ki = iter(jax.random.split(key, 64))
    params = {"stem": make_conv_bn_params(next(ki), 7, 3, 64)}
    inplanes = 64
    layers = []
    # resnext50_32x4d: layers [3,4,6,3], groups=32, width_per_group=4
    for planes, nblocks in ((64, 3), (128, 4), (256, 6), (512, 3)):
        width = planes * 2
        outc = planes * 4
        blocks = []
        for bi in range(nblocks):
            blk = {}
            blk["w1"], blk["b1"] = make_conv_bn_params(next(ki), 1, inplanes, width)
            blk["w2"], blk["b2"] = make_grouped_conv_bn_params(next(ki), width,
                                                               width, groups=32)
            blk["w3"], blk["b3"] = make_conv_bn_params(next(ki), 1, width, outc)
            if bi == 0:
                blk["wd"], blk["bd"] = make_conv_bn_params(next(ki), 1, inplanes, outc)
            blocks.append(blk)
            inplanes = outc
        layers.append(blocks)
    params["layers"] = layers
    return params


def make_head_params(key, latent_dim, hidden_dim, num_classes):
    k1, k2, k3, k4 = jax.random.split(key, 4)
    stdv = 1.0 / (hidden_dim ** 0.5)
    w_ih = jax.random.uniform(k1, (4 * hidden_dim, latent_dim), jnp.float32,
                              -stdv, stdv)
    w_hh = jax.random.uniform(k2, (4 * hidden_dim, hidden_dim), jnp.float32,
                              -stdv, stdv)
    # NOTE: Model passes `bidirectional` as nn.LSTM's 4th positional arg,
    # which is actually `bias`; with the default (False) the LSTM has no bias.
    lstm_bias = jnp.zeros((4 * hidden_dim,), jnp.float32)
    w_lin = jax.random.uniform(k3, (num_classes, hidden_dim), jnp.float32,
                               -stdv, stdv)
    b_lin = jax.random.uniform(k4, (num_classes,), jnp.float32, -stdv, stdv)
    return {"w_ih_t": w_ih.T.astype(jnp.bfloat16),
            "w_hh_t": w_hh.T.astype(jnp.bfloat16),
            "lstm_bias": lstm_bias,
            "w_lin_t": w_lin.T.astype(jnp.bfloat16),
            "b_lin": b_lin}


# ---------------------------------------------------------------------------
# Forward pass (mirrors Model.forward).
# ---------------------------------------------------------------------------
def bottleneck_forward(x, blk, stride):
    out = conv_bn(x, blk["w1"], blk["b1"], stride=1, padding=0, relu=True)
    out = grouped_conv_bn(out, blk["w2"], blk["b2"], stride=stride, relu=True)
    if "wd" in blk:
        identity = conv_bn(x, blk["wd"], blk["bd"], stride=stride, padding=0,
                           relu=False)
    else:
        identity = x
    # residual add + ReLU fused into the 3rd conv's matmul epilogue.
    return conv_bn(out, blk["w3"], blk["b3"], identity,
                   stride=1, padding=0, relu=True)


def backbone_forward(x_nhwc, params):
    x = conv_bn(x_nhwc, params["stem"][0], params["stem"][1],
                stride=2, padding=3, relu=True)
    x = maxpool_3x3_s2_p1(x)
    for li, blocks in enumerate(params["layers"]):
        stride0 = 1 if li == 0 else 2
        for bi, blk in enumerate(blocks):
            x = bottleneck_forward(x, blk, stride0 if bi == 0 else 1)
    return x                                      # (N, H/32, W/32, 2048) bf16


def model_forward(x, params):
    B, S, C, H, W = x.shape
    x = x.reshape(B * S, C, H, W)
    x = jnp.transpose(x, (0, 2, 3, 1)).astype(jnp.bfloat16)   # NCHW -> NHWC
    fmap = backbone_forward(x, params["backbone"])
    N, Hf, Wf, Cf = fmap.shape
    pooled = mean_spatial(fmap.reshape(N, Hf * Wf, Cf))        # AdaptiveAvgPool2d(1)
    seq = pooled.reshape(B, S, Cf)
    hp = params["head"]
    # nn.LSTM is seq-major (batch_first=False): like the torch code, dim 0
    # (batch B) is treated as time and dim 1 (seq S) as the LSTM batch.
    xproj = matmul_bias_act(seq.reshape(B * S, Cf), hp["w_ih_t"],
                            hp["lstm_bias"], relu=False,
                            out_dtype=jnp.float32).reshape(B, S, -1)
    x_lstm = lstm_forward(xproj, hp["w_hh_t"])                 # (B, S, hidden)
    last = x_lstm[:, -1, :]
    # TODO(synk): nn.Dropout(0.4) treated as identity (inference semantics).
    logits = matmul_bias_act(last, hp["w_lin_t"], hp["b_lin"], relu=False,
                             out_dtype=jnp.float32)
    fmap_nchw = jnp.transpose(fmap, (0, 3, 1, 2)).astype(jnp.float32)  # NCHW
    return fmap_nchw, logits


if __name__ == "__main__":
    key = jax.random.PRNGKey(0)
    kx, kb, kh = jax.random.split(key, 3)

    B, S, C, H, W = 2, 2, 3, 64, 64
    latent_dim, hidden_dim, num_classes = 2048, 2048, 2

    x = jax.random.normal(kx, (B, S, C, H, W), jnp.float32)
    params = {
        "backbone": make_backbone_params(kb),
        "head": make_head_params(kh, latent_dim, hidden_dim, num_classes),
    }

    fmap, logits = model_forward(x, params)
    fmap, logits = jax.block_until_ready((fmap, logits))

    assert fmap.shape == (B * S, 2048, H // 32, W // 32), fmap.shape
    assert logits.shape == (B, num_classes), logits.shape
    assert bool(jnp.all(jnp.isfinite(fmap))) and bool(jnp.all(jnp.isfinite(logits)))
    print("KERNEL_OK")
</pallas_src>

<mosaic_0001>
module attributes {stable_mosaic.version = 11 : i64} {
  func.func @_matmul_kernel(%arg0: i32, %arg1: i32, %arg2: i32, %arg3: memref<256x256xbf16, #tpu.memory_space<vmem>>, %arg4: memref<256x128xbf16, #tpu.memory_space<vmem>>, %arg5: memref<1x128xf32, #tpu.memory_space<vmem>>, %arg6: memref<256x128xbf16, #tpu.memory_space<vmem>>, %arg7: memref<256x128xf32, #tpu.memory_space<vmem>>) attributes {dimension_semantics = [#tpu.dimension_semantics<parallel>, #tpu.dimension_semantics<parallel>, #tpu.dimension_semantics<arbitrary>], iteration_bounds = array<i64: 16, 1, 1>, scalar_prefetch = 0 : i64, scratch_operands = 1 : i64, tpu.core_type = #tpu.core_type<tc>, window_params = [{transform_indices = @transform_0, window_bounds = array<i64: 256, 256>}, {transform_indices = @transform_1, window_bounds = array<i64: 256, 128>}, {transform_indices = @transform_2, window_bounds = array<i64: 1, 128>}, {transform_indices = @transform_3, window_bounds = array<i64: 256, 128>}]} {
    %c0_i32 = arith.constant 0 : i32
    %0 = arith.cmpi eq, %arg2, %c0_i32 : i32
    %1 = arith.extui %0 : i1 to i32
    %c0_i32_0 = arith.constant 0 : i32
    %2 = arith.cmpi ne, %1, %c0_i32_0 : i32
    scf.if %2 {
      %cst_10 = arith.constant 0.000000e+00 : f32
      %12 = vector.broadcast %cst_10 : f32 to vector<256x128xf32>
      %c0_11 = arith.constant 0 : index
      %c0_12 = arith.constant 0 : index
      %13 = vector.load %arg7[%c0_11, %c0_12] : memref<256x128xf32, #tpu.memory_space<vmem>>, vector<256x128xf32>
      tpu.vector_store %arg7[%c0_11, %c0_12], %12 {strides = array<i32>} : memref<256x128xf32, #tpu.memory_space<vmem>>, vector<256x128xf32>,
    } else {
    }
    %c0 = arith.constant 0 : index
    %c0_1 = arith.constant 0 : index
    %3 = vector.load %arg7[%c0, %c0_1] : memref<256x128xf32, #tpu.memory_space<vmem>>, vector<256x128xf32>
    %c0_2 = arith.constant 0 : index
    %c0_3 = arith.constant 0 : index
    %4 = vector.load %arg3[%c0_2, %c0_3] : memref<256x256xbf16, #tpu.memory_space<vmem>>, vector<256x256xbf16>
    %c0_4 = arith.constant 0 : index
    %c0_5 = arith.constant 0 : index
    %5 = vector.load %arg4[%c0_4, %c0_5] : memref<256x128xbf16, #tpu.memory_space<vmem>>, vector<256x128xbf16>
    %cst = arith.constant dense<0.000000e+00> : vector<256x128xf32>
    %6 = tpu.matmul %4, %5, %cst {dimension_numbers = #tpu.dot_dimension_numbers<[1], [0], [0], [1], [0, 0, 1, 1], [], []>} : vector<256x256xbf16>, vector<256x128xbf16>, vector<256x128xf32> -> vector<256x128xf32>
    %7 = arith.addf %3, %6 : vector<256x128xf32>
    %c0_6 = arith.constant 0 : index
    %c0_7 = arith.constant 0 : index
    %8 = vector.load %arg7[%c0_6, %c0_7] : memref<256x128xf32, #tpu.memory_space<vmem>>, vector<256x128xf32>
    tpu.vector_store %arg7[%c0_6, %c0_7], %7 {strides = array<i32>} : memref<256x128xf32, #tpu.memory_space<vmem>>, vector<256x128xf32>,
    %c0_i32_8 = arith.constant 0 : i32
    %9 = arith.cmpi eq, %arg2, %c0_i32_8 : i32
    %10 = arith.extui %9 : i1 to i32
    %c0_i32_9 = arith.constant 0 : i32
    %11 = arith.cmpi ne, %10, %c0_i32_9 : i32
    scf.if %11 {
      %c0_10 = arith.constant 0 : index
      %c0_11 = arith.constant 0 : index
      %12 = vector.load %arg7[%c0_10, %c0_11] : memref<256x128xf32, #tpu.memory_space<vmem>>, vector<256x128xf32>
      %c0_12 = arith.constant 0 : index
      %c0_13 = arith.constant 0 : index
      %13 = vector.load %arg5[%c0_12, %c0_13] : memref<1x128xf32, #tpu.memory_space<vmem>>, vector<1x128xf32>
      %14 = vector.broadcast %13 : vector<1x128xf32> to vector<256x128xf32>
      %15 = arith.addf %12, %14 : vector<256x128xf32>
      %cst_14 = arith.constant 0.000000e+00 : f32
      %16 = vector.broadcast %cst_14 : f32 to vector<256x128xf32>
      %17 = arith.maximumf %15, %16 : vector<256x128xf32>
      %18 = arith.truncf %17 : vector<256x128xf32> to vector<256x128xbf16>
      %c0_15 = arith.constant 0 : index
      %c0_16 = arith.constant 0 : index
      %19 = vector.load %arg6[%c0_15, %c0_16] : memref<256x128xbf16, #tpu.memory_space<vmem>>, vector<256x128xbf16>
      tpu.vector_store %arg6[%c0_15, %c0_16], %18 {strides = array<i32>} : memref<256x128xbf16, #tpu.memory_space<vmem>>, vector<256x128xbf16>,
    } else {
    }
    return
  }
  func.func @transform_0(%arg0: i32, %arg1: i32, %arg2: i32) -> (i32, i32) {
    %c0_i32 = arith.constant 0 : i32
    return %arg0, %arg2 : i32, i32
  }
  func.func @transform_1(%arg0: i32, %arg1: i32, %arg2: i32) -> (i32, i32) {
    %c0_i32 = arith.constant 0 : i32
    return %arg2, %arg1 : i32, i32
  }
  func.func @transform_2(%arg0: i32, %arg1: i32, %arg2: i32) -> (i32, i32) {
    %c0_i32 = arith.constant 0 : i32
    %c0_i32_0 = arith.constant 0 : i32
    return %c0_i32, %arg1 : i32, i32
  }
  func.func @transform_3(%arg0: i32, %arg1: i32, %arg2: i32) -> (i32, i32) {
    %c0_i32 = arith.constant 0 : i32
    return %arg0, %arg1 : i32, i32
  }
}

</mosaic_0001>

<llo_original>
// kernel: matmul_bias_act.1
$region0: #{matmul_bias_act.1}
  #allocation0 [shape = 'u32[]', space=smem, size = 0x4, offset = 0x4, fixed_abs, tag = 'smem constant byte address 0x4 - core index']
  #allocation1 [shape = 'u32[144,128]{1,0:T(1,128)}', space=vmem, size = 0x12000, scoped, tag = 'internal scratch']
  #allocation2 [shape = 'f32[256,128]{1,0:T(8,128)}', space=vmem, size = 0x20000, scoped, tag = 'scratch operand']
  %s0 = inlined_call_operand.vmem [shape: bf16[4096,256], index: 0, kind: input, shape index: {}]
  %s1 = inlined_call_operand.vmem [shape: bf16[256,128], index: 1, kind: input, shape index: {}]
  %s2 = inlined_call_operand.vmem [shape: f32[1,128], index: 2, kind: input, shape index: {}]
  %s3 = inlined_call_operand.vmem [shape: bf16[4096,128], index: 3, kind: output, shape index: {}]
  %s4 = sld [smem:[#allocation0]]
  $region53: #{matmul_bias_act.1} parent=0
    _
  %s6 = ssub.s32 1, %s4
  %s7 = scalar_select 0, %s6, %s4
  loop: start=0, step=1, limit=18
  $region2: #{matmul_bias_act.1} parent=0 // loop_pre_header
    _
  $region3: #{matmul_bias_act.1} parent=0 // loop_header
    %s9 = sphi 0, %s13
    %p10 = scmp.ge.s32.totalorder %s9, 18
    %s16 = sphi 0, %s35
    %s17 = sphi 0, %s31
    %s18 = sphi 0, %s27
    %s19 = sphi 0, %s16
    %s20 = sphi 0, %s17
    %s21 = sphi 0, %s18
    %s22 = sphi 0, %s19
    %s23 = sphi 0, %s20
    %s24 = sphi 0, %s21
    %s40 = sphi 0, %s42
    %s43 = sphi 0, %s40
    %s44 = sphi 0, %s43
    %s60 = sphi 0, %s44
    %s68 = sphi 0, %s70
    %s71 = sphi 0, %s68
    %s72 = sphi 0, %s71
    %s88 = sphi 0, %s72
    %s94 = sphi 0, %s96
    %s97 = sphi 0, %s94
    %s98 = sphi 0, %s97
    %s114 = sphi 0, %s98
    %s122 = sphi 0, %s124
    %s125 = sphi 0, %s122
    %s126 = sphi 0, %s125
    %s142 = sphi 0, %s126
  $region4: #{matmul_bias_act.1} parent=0 // loop_header_branch
    %12 = sbr.rel (%p10) target = $region8
  $region5: #{matmul_bias_act.1} parent=0 // loop_body
    %s14 = ssub.s32 %s9, 1
    %s15 = ssub.s32 %s9, 2
    %s25 = sadd.s32 1, %s18
    %p26 = scmp.ge.s32.totalorder %s25, 1
    %s27 = scalar_select %p26, 0, %s25
    %s28 = sadd.s32 1, %s17
    %s29 = scalar_select %p26, %s28, %s17
    %p30 = scmp.ge.s32.totalorder %s29, 1
    %s31 = scalar_select %p30, 0, %s29
    %s32 = sadd.s32 1, %s16
    %s33 = scalar_select %p30, %s32, %s16
    %p34 = scmp.ge.s32.totalorder %s33, 16
    %s35 = scalar_select %p34, 0, %s33
    %s36 = ssub.s32 %s16, %s35
    %s37 = ssub.s32 %s18, %s27
    %s38 = sor.u32 %s36, %s37
    %p39 = scmp.eq.s32.totalorder %s38, 0
    %s41 = sadd.s32 %s40, 1
    %s42 = scalar_select %p39, %s40, %s41
    %p45 = pneg %p39
    %p46 = scmp.eq.s32.totalorder %s9, 15
    %p47 = por %p45, %p46
    %p48 = scmp.ne.s32.totalorder %s40, %s43
    %p49 = scmp.eq.s32.totalorder %s9, 0
    %p50 = por %p48, %p49
    %p51 = scmp.ne.s32.totalorder %s40, %s43
    %p52 = scmp.eq.s32.totalorder %s14, 15
    %p53 = por %p51, %p52
    %p54 = scmp.ne.s32.totalorder %s43, %s44
    %p55 = scmp.eq.s32.totalorder %s14, 0
    %p56 = por %p54, %p55
    %p57 = scmp.ne.s32.totalorder %s43, %s44
    %p58 = scmp.eq.s32.totalorder %s15, 15
    %p59 = por %p57, %p58
    %p61 = scmp.ne.s32.totalorder %s44, %s60
    %p62 = scmp.eq.s32.totalorder %s15, 0
    %p63 = por %p61, %p62
    %s64 = ssub.s32 %s18, %s27
    %s65 = ssub.s32 %s17, %s31
    %s66 = sor.u32 %s64, %s65
    %p67 = scmp.eq.s32.totalorder %s66, 0
    %s69 = sadd.s32 %s68, 1
    %s70 = scalar_select %p67, %s68, %s69
    %p73 = pneg %p67
    %p74 = scmp.eq.s32.totalorder %s9, 15
    %p75 = por %p73, %p74
    %p76 = scmp.ne.s32.totalorder %s68, %s71
    %p77 = scmp.eq.s32.totalorder %s9, 0
    %p78 = por %p76, %p77
    %p79 = scmp.ne.s32.totalorder %s68, %s71
    %p80 = scmp.eq.s32.totalorder %s14, 15
    %p81 = por %p79, %p80
    %p82 = scmp.ne.s32.totalorder %s71, %s72
    %p83 = scmp.eq.s32.totalorder %s14, 0
    %p84 = por %p82, %p83
    %p85 = scmp.ne.s32.totalorder %s71, %s72
    %p86 = scmp.eq.s32.totalorder %s15, 15
    %p87 = por %p85, %p86
    %p89 = scmp.ne.s32.totalorder %s72, %s88
    %p90 = scmp.eq.s32.totalorder %s15, 0
    %p91 = por %p89, %p90
    %s92 = ssub.s32 %s17, %s31
    %p93 = scmp.eq.s32.totalorder %s92, 0
    %s95 = sadd.s32 %s94, 1
    %s96 = scalar_select %p93, %s94, %s95
    %p99 = pneg %p93
    %p100 = scmp.eq.s32.totalorder %s9, 15
    %p101 = por %p99, %p100
    %p102 = scmp.ne.s32.totalorder %s94, %s97
    %p103 = scmp.eq.s32.totalorder %s9, 0
    %p104 = por %p102, %p103
    %p105 = scmp.ne.s32.totalorder %s94, %s97
    %p106 = scmp.eq.s32.totalorder %s14, 15
    %p107 = por %p105, %p106
    %p108 = scmp.ne.s32.totalorder %s97, %s98
    %p109 = scmp.eq.s32.totalorder %s14, 0
    %p110 = por %p108, %p109
    %p111 = scmp.ne.s32.totalorder %s97, %s98
    %p112 = scmp.eq.s32.totalorder %s15, 15
    %p113 = por %p111, %p112
    %p115 = scmp.ne.s32.totalorder %s98, %s114
    %p116 = scmp.eq.s32.totalorder %s15, 0
    %p117 = por %p115, %p116
    %s118 = ssub.s32 %s16, %s35
    %s119 = ssub.s32 %s17, %s31
    %s120 = sor.u32 %s118, %s119
    %p121 = scmp.eq.s32.totalorder %s120, 0
    %s123 = sadd.s32 %s122, 1
    %s124 = scalar_select %p121, %s122, %s123
    %p127 = pneg %p121
    %p128 = scmp.eq.s32.totalorder %s9, 15
    %p129 = por %p127, %p128
    %p130 = scmp.ne.s32.totalorder %s122, %s125
    %p131 = scmp.eq.s32.totalorder %s9, 0
    %p132 = por %p130, %p131
    %p133 = scmp.ne.s32.totalorder %s122, %s125
    %p134 = scmp.eq.s32.totalorder %s14, 15
    %p135 = por %p133, %p134
    %p136 = scmp.ne.s32.totalorder %s125, %s126
    %p137 = scmp.eq.s32.totalorder %s14, 0
    %p138 = por %p136, %p137
    %p139 = scmp.ne.s32.totalorder %s125, %s126
    %p140 = scmp.eq.s32.totalorder %s15, 15
    %p141 = por %p139, %p140
    %p143 = scmp.ne.s32.totalorder %s126, %s142
    %p144 = scmp.eq.s32.totalorder %s15, 0
    %p145 = por %p143, %p144
    %p146 = scmp.le.s32.totalorder 1, %s9
    %p147 = scmp.lt.s32.totalorder %s9, 17
    %p148 = pnand %p146, %p147
    %p149 = pneg %p148
    // Predicated region
    $region9: #{matmul_bias_act.1} parent=5 // pred_check
      _
    $region10: #{matmul_bias_act.1} parent=5 // pred_check_branch
      %151 = sbr.rel (%p148) target = $region12
    $region11: #{matmul_bias_act.1} parent=5 // pred_region
      %s152 = ssub.s32 %s9, 1
      // Predicated region
      $region13: #{matmul_bias_act.1} parent=11 // pred_check
        %p153 = pneg %p84
      $region14: #{matmul_bias_act.1} parent=11 // pred_check_branch
        %155 = sbr.rel (%p153) target = $region16
      $region15: #{matmul_bias_act.1} parent=11 // pred_region
        %s156 = smul.u32 32, %s21
        %p157 = scmp.lt.s32.totalorder %s156, 31
        %s158 = scalar_select %p157, %s156, 31
        %p159 = scmp.lt.s32.totalorder %s20, 0
        %s160 = scalar_select %p159, %s20, 0
        %s161 = sadd.s32 %s160, %s158
        %s162 = smul.addr %s161, 4
        %s163 = scalar_lea.vmem %s1, %s162
        %s164 = smul.u32 32, %s21
      $region16: #{matmul_bias_act.1} parent=11 // pred_fallthru
        _
      // Predicated region
      $region17: #{matmul_bias_act.1} parent=11 // pred_check
        %p165 = pneg %p110
      $region18: #{matmul_bias_act.1} parent=11 // pred_check_branch
        %167 = sbr.rel (%p165) target = $region20
      $region19: #{matmul_bias_act.1} parent=11 // pred_region
        %p168 = scmp.lt.s32.totalorder %s20, 0
        %s169 = scalar_select %p168, %s20, 0
        %s170 = scalar_lea.vmem %s2, %s169
      $region20: #{matmul_bias_act.1} parent=11 // pred_fallthru
        _
    $region12: #{matmul_bias_act.1} parent=5 // pred_fallthru
      _
    %p171 = scmp.lt.s32.totalorder %s9, 16
    // Predicated region
    $region21: #{matmul_bias_act.1} parent=5 // pred_check
      %p172 = pneg %p171
    $region22: #{matmul_bias_act.1} parent=5 // pred_check_branch
      %174 = sbr.rel (%p172) target = $region24
    $region23: #{matmul_bias_act.1} parent=5 // pred_region
      // Predicated region
      $region25: #{matmul_bias_act.1} parent=23 // pred_check
        %p175 = pneg %p50
      $region26: #{matmul_bias_act.1} parent=23 // pred_check_branch
        %177 = sbr.rel (%p175) target = $region28
      $region27: #{matmul_bias_act.1} parent=23 // pred_region
        %s178 = smul.u32 32, %s16
        %s179 = smul.u32 2, %s18
        %p180 = scmp.lt.s32.totalorder %s178, 511
        %s181 = scalar_select %p180, %s178, 511
        %p182 = scmp.lt.s32.totalorder %s179, 1
        %s183 = scalar_select %p182, %s179, 1
        %s184 = smul.addr %s181, 2
        %s185 = sadd.s32 %s183, %s184
        %s186 = smul.addr %s185, 4
        %s187 = scalar_lea.vmem %s0, %s186
        %s188 = smul.u32 32, %s16
        %s189 = smul.u32 2, %s18
      $region28: #{matmul_bias_act.1} parent=23 // pred_fallthru
        _
    $region24: #{matmul_bias_act.1} parent=5 // pred_fallthru
      _
    %p190 = scmp.le.s32.totalorder 1, %s9
    %p191 = scmp.lt.s32.totalorder %s9, 17
    %p192 = pnand %p190, %p191
    %p193 = pneg %p192
    // Predicated region
    $region29: #{matmul_bias_act.1} parent=5 // pred_check
      _
    $region30: #{matmul_bias_act.1} parent=5 // pred_check_branch
      %195 = sbr.rel (%p192) target = $region32
    $region31: #{matmul_bias_act.1} parent=5 // pred_region
      %s196 = ssub.s32 %s9, 1
      %s197 = smul.u32 32, %s19
      %s198 = smul.u32 2, %s21
      %p199 = scmp.lt.s32.totalorder %s197, 511
      %s200 = scalar_select %p199, %s197, 511
      %p201 = scmp.lt.s32.totalorder %s198, 1
      %s202 = scalar_select %p201, %s198, 1
      %s203 = smul.addr %s200, 2
      %s204 = sadd.s32 %s202, %s203
      %s205 = smul.addr %s204, 4
      %s206 = scalar_lea.vmem %s0, %s205
      %p207 = pneg %p56
      %p208 = pneg %p53
      %s209 = smul.u32 32, %s21
      %p210 = scmp.lt.s32.totalorder %s209, 31
      %s211 = scalar_select %p210, %s209, 31
      %p212 = scmp.lt.s32.totalorder %s20, 0
      %s213 = scalar_select %p212, %s20, 0
      %s214 = sadd.s32 %s213, %s211
      %s215 = smul.addr %s214, 4
      %s216 = scalar_lea.vmem %s1, %s215
      %p217 = pneg %p84
      %p218 = pneg %p81
      %p219 = scmp.lt.s32.totalorder %s20, 0
      %s220 = scalar_select %p219, %s20, 0
      %s221 = scalar_lea.vmem %s2, %s220
      %p222 = pneg %p110
      %p223 = pneg %p107
      %p224 = pneg %p138
      %p225 = pneg %p135
      %s226 = smul.u32 32, %s19
      %p227 = scmp.lt.s32.totalorder %s226, 511
      %s228 = scalar_select %p227, %s226, 511
      %p229 = scmp.lt.s32.totalorder %s20, 0
      %s230 = scalar_select %p229, %s20, 0
      %s231 = sadd.s32 %s230, %s228
      %s232 = smul.addr %s231, 4
      %s233 = scalar_lea.vmem %s3, %s232
      %s234 = smul.u32 32, %s19
      %s235 = smul.u32 2, %s21
      %p236 = scmp.lt.s32.totalorder %s234, 511
      %s237 = scalar_select %p236, %s234, 511
      %p238 = scmp.lt.s32.totalorder %s235, 1
      %s239 = scalar_select %p238, %s235, 1
      %s240 = smul.addr %s237, 2
      %s241 = sadd.s32 %s239, %s240
      %s242 = smul.addr %s241, 4
      %s243 = scalar_lea.vmem %s0, %s242
      %s244 = smul.u32 32, %s19
      %s245 = smul.u32 2, %s21
      %s246 = smul.u32 32, %s21
      %p247 = scmp.lt.s32.totalorder %s246, 31
      %s248 = scalar_select %p247, %s246, 31
      %p249 = scmp.lt.s32.totalorder %s20, 0
      %s250 = scalar_select %p249, %s20, 0
      %s251 = sadd.s32 %s250, %s248
      %s252 = smul.addr %s251, 4
      %s253 = scalar_lea.vmem %s1, %s252
      %s254 = smul.u32 32, %s21
      %p255 = scmp.lt.s32.totalorder %s20, 0
      %s256 = scalar_select %p255, %s20, 0
      %s257 = scalar_lea.vmem %s2, %s256
      %s258 = smul.u32 32, %s19
      %p259 = scmp.lt.s32.totalorder %s258, 511
      %s260 = scalar_select %p259, %s258, 511
      %p261 = scmp.lt.s32.totalorder %s20, 0
      %s262 = scalar_select %p261, %s20, 0
      %s263 = sadd.s32 %s262, %s260
      %s264 = smul.addr %s263, 4
      %s265 = scalar_lea.vmem %s3, %s264
      %s266 = smul.u32 32, %s19
      %p268 = scmp.eq.s32.totalorder %s21, 0
      // Predicated region
      $region33: #{matmul_bias_act.1} parent=31 // pred_check
        %p269 = pneg %p268
      $region34: #{matmul_bias_act.1} parent=31 // pred_check_branch
        %271 = sbr.rel (%p269) target = $region36
      $region35: #{matmul_bias_act.1} parent=31 // pred_region
        %272 = vst [vmem:[#allocation2] sm:$0xff] 0.0
        %273 = vst [vmem:[#allocation2 + $0x8] sm:$0xff] 0.0
        %274 = vst [vmem:[#allocation2 + $0x10] sm:$0xff] 0.0
        %275 = vst [vmem:[#allocation2 + $0x18] sm:$0xff] 0.0
        %276 = vst [vmem:[#allocation2 + $0x20] sm:$0xff] 0.0
        %277 = vst [vmem:[#allocation2 + $0x28] sm:$0xff] 0.0
        %278 = vst [vmem:[#allocation2 + $0x30] sm:$0xff] 0.0
        %279 = vst [vmem:[#allocation2 + $0x38] sm:$0xff] 0.0
        %280 = vst [vmem:[#allocation2 + $0x40] sm:$0xff] 0.0
        %281 = vst [vmem:[#allocation2 + $0x48] sm:$0xff] 0.0
        %282 = vst [vmem:[#allocation2 + $0x50] sm:$0xff] 0.0
        %283 = vst [vmem:[#allocation2 + $0x58] sm:$0xff] 0.0
        %284 = vst [vmem:[#allocation2 + $0x60] sm:$0xff] 0.0
        %285 = vst [vmem:[#allocation2 + $0x68] sm:$0xff] 0.0
        %286 = vst [vmem:[#allocation2 + $0x70] sm:$0xff] 0.0
        %287 = vst [vmem:[#allocation2 + $0x78] sm:$0xff] 0.0
        %288 = vst [vmem:[#allocation2 + $0x80] sm:$0xff] 0.0
        %289 = vst [vmem:[#allocation2 + $0x88] sm:$0xff] 0.0
        %290 = vst [vmem:[#allocation2 + $0x90] sm:$0xff] 0.0
        %291 = vst [vmem:[#allocation2 + $0x98] sm:$0xff] 0.0
        %292 = vst [vmem:[#allocation2 + $0xa0] sm:$0xff] 0.0
        %293 = vst [vmem:[#allocation2 + $0xa8] sm:$0xff] 0.0
        %294 = vst [vmem:[#allocation2 + $0xb0] sm:$0xff] 0.0
        %295 = vst [vmem:[#allocation2 + $0xb8] sm:$0xff] 0.0
        %296 = vst [vmem:[#allocation2 + $0xc0] sm:$0xff] 0.0
        %297 = vst [vmem:[#allocation2 + $0xc8] sm:$0xff] 0.0
        %298 = vst [vmem:[#allocation2 + $0xd0] sm:$0xff] 0.0
        %299 = vst [vmem:[#allocation2 + $0xd8] sm:$0xff] 0.0
        %300 = vst [vmem:[#allocation2 + $0xe0] sm:$0xff] 0.0
        %301 = vst [vmem:[#allocation2 + $0xe8] sm:$0xff] 0.0
        %302 = vst [vmem:[#allocation2 + $0xf0] sm:$0xff] 0.0
        %303 = vst [vmem:[#allocation2 + $0xf8] sm:$0xff] 0.0
      $region36: #{matmul_bias_act.1} parent=31 // pred_fallthru
        _
      %v304 = vld [vmem:[#allocation2] sm:$0xff]
      %v305 = vld [vmem:[#allocation2 + $0x8] sm:$0xff]
      %v306 = vld [vmem:[#allocation2 + $0x10] sm:$0xff]
      %v307 = vld [vmem:[#allocation2 + $0x18] sm:$0xff]
      %v308 = vld [vmem:[#allocation2 + $0x20] sm:$0xff]
      %v309 = vld [vmem:[#allocation2 + $0x28] sm:$0xff]
      %v310 = vld [vmem:[#allocation2 + $0x30] sm:$0xff]
      %v311 = vld [vmem:[#allocation2 + $0x38] sm:$0xff]
      %v312 = vld [vmem:[#allocation2 + $0x40] sm:$0xff]
      %v313 = vld [vmem:[#allocation2 + $0x48] sm:$0xff]
      %v314 = vld [vmem:[#allocation2 + $0x50] sm:$0xff]
      %v315 = vld [vmem:[#allocation2 + $0x58] sm:$0xff]
      %v316 = vld [vmem:[#allocation2 + $0x60] sm:$0xff]
      %v317 = vld [vmem:[#allocation2 + $0x68] sm:$0xff]
      %v318 = vld [vmem:[#allocation2 + $0x70] sm:$0xff]
      %v319 = vld [vmem:[#allocation2 + $0x78] sm:$0xff]
      %v320 = vld [vmem:[#allocation2 + $0x80] sm:$0xff]
      %v321 = vld [vmem:[#allocation2 + $0x88] sm:$0xff]
      %v322 = vld [vmem:[#allocation2 + $0x90] sm:$0xff]
      %v323 = vld [vmem:[#allocation2 + $0x98] sm:$0xff]
      %v324 = vld [vmem:[#allocation2 + $0xa0] sm:$0xff]
      %v325 = vld [vmem:[#allocation2 + $0xa8] sm:$0xff]
      %v326 = vld [vmem:[#allocation2 + $0xb0] sm:$0xff]
      %v327 = vld [vmem:[#allocation2 + $0xb8] sm:$0xff]
      %v328 = vld [vmem:[#allocation2 + $0xc0] sm:$0xff]
      %v329 = vld [vmem:[#allocation2 + $0xc8] sm:$0xff]
      %v330 = vld [vmem:[#allocation2 + $0xd0] sm:$0xff]
      %v331 = vld [vmem:[#allocation2 + $0xd8] sm:$0xff]
      %v332 = vld [vmem:[#allocation2 + $0xe0] sm:$0xff]
      %v333 = vld [vmem:[#allocation2 + $0xe8] sm:$0xff]
      %v334 = vld [vmem:[#allocation2 + $0xf0] sm:$0xff]
      %v335 = vld [vmem:[#allocation2 + $0xf8] sm:$0xff]
      %v336 = vld [vmem:[%s243] sm:$0xff]
      %v337 = vld [vmem:[%s243 + $0x8] sm:$0xff]
      %v338 = vld [vmem:[%s243 + $0x10] sm:$0xff]
      %v339 = vld [vmem:[%s243 + $0x18] sm:$0xff]
      %v340 = vld [vmem:[%s243 + $0x20] sm:$0xff]
      %v341 = vld [vmem:[%s243 + $0x28] sm:$0xff]
      %v342 = vld [vmem:[%s243 + $0x30] sm:$0xff]
      %v343 = vld [vmem:[%s243 + $0x38] sm:$0xff]
      %v344 = vld [vmem:[%s243 + $0x40] sm:$0xff]
      %v345 = vld [vmem:[%s243 + $0x48] sm:$0xff]
      %v346 = vld [vmem:[%s243 + $0x50] sm:$0xff]
      %v347 = vld [vmem:[%s243 + $0x58] sm:$0xff]
      %v348 = vld [vmem:[%s243 + $0x60] sm:$0xff]
      %v349 = vld [vmem:[%s243 + $0x68] sm:$0xff]
      %v350 = vld [vmem:[%s243 + $0x70] sm:$0xff]
      %v351 = vld [vmem:[%s243 + $0x78] sm:$0xff]
      %v352 = vld [vmem:[%s243 + $0x80] sm:$0xff]
      %v353 = vld [vmem:[%s243 + $0x88] sm:$0xff]
      %v354 = vld [vmem:[%s243 + $0x90] sm:$0xff]
      %v355 = vld [vmem:[%s243 + $0x98] sm:$0xff]
      %v356 = vld [vmem:[%s243 + $0xa0] sm:$0xff]
      %v357 = vld [vmem:[%s243 + $0xa8] sm:$0xff]
      %v358 = vld [vmem:[%s243 + $0xb0] sm:$0xff]
      %v359 = vld [vmem:[%s243 + $0xb8] sm:$0xff]
      %v360 = vld [vmem:[%s243 + $0xc0] sm:$0xff]
      %v361 = vld [vmem:[%s243 + $0xc8] sm:$0xff]
      %v362 = vld [vmem:[%s243 + $0xd0] sm:$0xff]
      %v363 = vld [vmem:[%s243 + $0xd8] sm:$0xff]
      %v364 = vld [vmem:[%s243 + $0xe0] sm:$0xff]
      %v365 = vld [vmem:[%s243 + $0xe8] sm:$0xff]
      %v366 = vld [vmem:[%s243 + $0xf0] sm:$0xff]
      %v367 = vld [vmem:[%s243 + $0xf8] sm:$0xff]
      %v368 = vld [vmem:[%s253] sm:$0xf]
      %v369 = vld [vmem:[%s253 + $0x4] sm:$0xf]
      %v370 = vld [vmem:[%s253 + $0x8] sm:$0xf]
      %v371 = vld [vmem:[%s253 + $0xc] sm:$0xf]
      %v372 = vld [vmem:[%s253 + $0x10] sm:$0xf]
      %v373 = vld [vmem:[%s253 + $0x14] sm:$0xf]
      %v374 = vld [vmem:[%s253 + $0x18] sm:$0xf]
      %v375 = vld [vmem:[%s253 + $0x1c] sm:$0xf]
      %v376 = vld [vmem:[%s253 + $0x20] sm:$0xf]
      %v377 = vld [vmem:[%s253 + $0x24] sm:$0xf]
      %v378 = vld [vmem:[%s253 + $0x28] sm:$0xf]
      %v379 = vld [vmem:[%s253 + $0x2c] sm:$0xf]
      %v380 = vld [vmem:[%s253 + $0x30] sm:$0xf]
      %v381 = vld [vmem:[%s253 + $0x34] sm:$0xf]
      %v382 = vld [vmem:[%s253 + $0x38] sm:$0xf]
      %v383 = vld [vmem:[%s253 + $0x3c] sm:$0xf]
      %v384 = vld [vmem:[%s253 + $0x40] sm:$0xf]
      %v385 = vld [vmem:[%s253 + $0x44] sm:$0xf]
      %v386 = vld [vmem:[%s253 + $0x48] sm:$0xf]
      %v387 = vld [vmem:[%s253 + $0x4c] sm:$0xf]
      %v388 = vld [vmem:[%s253 + $0x50] sm:$0xf]
      %v389 = vld [vmem:[%s253 + $0x54] sm:$0xf]
      %v390 = vld [vmem:[%s253 + $0x58] sm:$0xf]
      %v391 = vld [vmem:[%s253 + $0x5c] sm:$0xf]
      %v392 = vld [vmem:[%s253 + $0x60] sm:$0xf]
      %v393 = vld [vmem:[%s253 + $0x64] sm:$0xf]
      %v394 = vld [vmem:[%s253 + $0x68] sm:$0xf]
      %v395 = vld [vmem:[%s253 + $0x6c] sm:$0xf]
      %v396 = vld [vmem:[%s253 + $0x70] sm:$0xf]
      %v397 = vld [vmem:[%s253 + $0x74] sm:$0xf]
      %v398 = vld [vmem:[%s253 + $0x78] sm:$0xf]
      %v399 = vld [vmem:[%s253 + $0x7c] sm:$0xf]
      %v432 = vunpack.c.l.b16 %v336
      %v433 = vunpack.c.h.b16 %v336
      %v434 = vunpack.c.l.b16 %v337
      %v435 = vunpack.c.h.b16 %v337
      %v436 = vunpack.c.l.b16 %v338
      %v437 = vunpack.c.h.b16 %v338
      %v438 = vunpack.c.l.b16 %v339
      %v439 = vunpack.c.h.b16 %v339
      %v440 = vunpack.c.l.b16 %v340
      %v441 = vunpack.c.h.b16 %v340
      %v442 = vunpack.c.l.b16 %v341
      %v443 = vunpack.c.h.b16 %v341
      %v444 = vunpack.c.l.b16 %v342
      %v445 = vunpack.c.h.b16 %v342
      %v446 = vunpack.c.l.b16 %v343
      %v447 = vunpack.c.h.b16 %v343
      %v448 = vunpack.c.l.b16 %v344
      %v449 = vunpack.c.h.b16 %v344
      %v450 = vunpack.c.l.b16 %v345
      %v451 = vunpack.c.h.b16 %v345
      %v452 = vunpack.c.l.b16 %v346
      %v453 = vunpack.c.h.b16 %v346
      %v454 = vunpack.c.l.b16 %v347
      %v455 = vunpack.c.h.b16 %v347
      %v456 = vunpack.c.l.b16 %v348
      %v457 = vunpack.c.h.b16 %v348
      %v458 = vunpack.c.l.b16 %v349
      %v459 = vunpack.c.h.b16 %v349
      %v460 = vunpack.c.l.b16 %v350
      %v461 = vunpack.c.h.b16 %v350
      %v462 = vunpack.c.l.b16 %v351
      %v463 = vunpack.c.h.b16 %v351
      %v464 = vunpack.c.l.b16 %v352
      %v465 = vunpack.c.h.b16 %v352
      %v466 = vunpack.c.l.b16 %v353
      %v467 = vunpack.c.h.b16 %v353
      %v468 = vunpack.c.l.b16 %v354
      %v469 = vunpack.c.h.b16 %v354
      %v470 = vunpack.c.l.b16 %v355
      %v471 = vunpack.c.h.b16 %v355
      %v472 = vunpack.c.l.b16 %v356
      %v473 = vunpack.c.h.b16 %v356
      %v474 = vunpack.c.l.b16 %v357
      %v475 = vunpack.c.h.b16 %v357
      %v476 = vunpack.c.l.b16 %v358
      %v477 = vunpack.c.h.b16 %v358
      %v478 = vunpack.c.l.b16 %v359
      %v479 = vunpack.c.h.b16 %v359
      %v480 = vunpack.c.l.b16 %v360
      %v481 = vunpack.c.h.b16 %v360
      %v482 = vunpack.c.l.b16 %v361
      %v483 = vunpack.c.h.b16 %v361
      %v484 = vunpack.c.l.b16 %v362
      %v485 = vunpack.c.h.b16 %v362
      %v486 = vunpack.c.l.b16 %v363
      %v487 = vunpack.c.h.b16 %v363
      %v488 = vunpack.c.l.b16 %v364
      %v489 = vunpack.c.h.b16 %v364
      %v490 = vunpack.c.l.b16 %v365
      %v491 = vunpack.c.h.b16 %v365
      %v492 = vunpack.c.l.b16 %v366
      %v493 = vunpack.c.h.b16 %v366
      %v494 = vunpack.c.l.b16 %v367
      %v495 = vunpack.c.h.b16 %v367
      %v496 = vpack.c.b16 %v434, %v432
      %v497 = vpack.c.b16 %v435, %v433
      %v498 = vpack.c.b16 %v438, %v436
      %v499 = vpack.c.b16 %v439, %v437
      %v500 = vpack.c.b16 %v442, %v440
      %v501 = vpack.c.b16 %v443, %v441
      %v502 = vpack.c.b16 %v446, %v444
      %v503 = vpack.c.b16 %v447, %v445
      %v504 = vpack.c.b16 %v450, %v448
      %v505 = vpack.c.b16 %v451, %v449
      %v506 = vpack.c.b16 %v454, %v452
      %v507 = vpack.c.b16 %v455, %v453
      %v508 = vpack.c.b16 %v458, %v456
      %v509 = vpack.c.b16 %v459, %v457
      %v510 = vpack.c.b16 %v462, %v460
      %v511 = vpack.c.b16 %v463, %v461
      %v512 = vpack.c.b16 %v466, %v464
      %v513 = vpack.c.b16 %v467, %v465
      %v514 = vpack.c.b16 %v470, %v468
      %v515 = vpack.c.b16 %v471, %v469
      %v516 = vpack.c.b16 %v474, %v472
      %v517 = vpack.c.b16 %v475, %v473
      %v518 = vpack.c.b16 %v478, %v476
      %v519 = vpack.c.b16 %v479, %v477
      %v520 = vpack.c.b16 %v482, %v480
      %v521 = vpack.c.b16 %v483, %v481
      %v522 = vpack.c.b16 %v486, %v484
      %v523 = vpack.c.b16 %v487, %v485
      %v524 = vpack.c.b16 %v490, %v488
      %v525 = vpack.c.b16 %v491, %v489
      %v526 = vpack.c.b16 %v494, %v492
      %v527 = vpack.c.b16 %v495, %v493
      %v592 = vunpack.c.l.b16 %v368
      %v593 = vunpack.c.l.b16 %v369
      %v594 = vunpack.c.l.b16 %v370
      %v595 = vunpack.c.l.b16 %v371
      %v596 = vunpack.c.l.b16 %v372
      %v597 = vunpack.c.l.b16 %v373
      %v598 = vunpack.c.l.b16 %v374
      %v599 = vunpack.c.l.b16 %v375
      %v600 = vunpack.c.l.b16 %v376
      %v601 = vunpack.c.l.b16 %v377
      %v602 = vunpack.c.l.b16 %v378
      %v603 = vunpack.c.l.b16 %v379
      %v604 = vunpack.c.l.b16 %v380
      %v605 = vunpack.c.l.b16 %v381
      %v606 = vunpack.c.l.b16 %v382
      %v607 = vunpack.c.l.b16 %v383
      %v608 = vunpack.c.l.b16 %v384
      %v609 = vunpack.c.l.b16 %v385
      %v610 = vunpack.c.l.b16 %v386
      %v611 = vunpack.c.l.b16 %v387
      %v612 = vunpack.c.l.b16 %v388
      %v613 = vunpack.c.l.b16 %v389
      %v614 = vunpack.c.l.b16 %v390
      %v615 = vunpack.c.l.b16 %v391
      %v616 = vunpack.c.l.b16 %v392
      %v617 = vunpack.c.l.b16 %v393
      %v618 = vunpack.c.l.b16 %v394
      %v619 = vunpack.c.l.b16 %v395
      %v620 = vunpack.c.l.b16 %v396
      %v621 = vunpack.c.l.b16 %v397
      %v622 = vunpack.c.l.b16 %v398
      %v623 = vunpack.c.l.b16 %v399
      %v624 = vpack.c.b16 %v593, %v592
      %v625 = vpack.c.b16 %v595, %v594
      %v626 = vpack.c.b16 %v597, %v596
      %v627 = vpack.c.b16 %v599, %v598
      %v628 = vpack.c.b16 %v601, %v600
      %v629 = vpack.c.b16 %v603, %v602
      %v630 = vpack.c.b16 %v605, %v604
      %v631 = vpack.c.b16 %v607, %v606
      %v632 = vpack.c.b16 %v609, %v608
      %v633 = vpack.c.b16 %v611, %v610
      %v634 = vpack.c.b16 %v613, %v612
      %v635 = vpack.c.b16 %v615, %v614
      %v636 = vpack.c.b16 %v617, %v616
      %v637 = vpack.c.b16 %v619, %v618
      %v638 = vpack.c.b16 %v621, %v620
      %v639 = vpack.c.b16 %v623, %v622
      %656 = vmatprep.subr.bf16.mxu0 0
      %657 = vmatpush1.bf16.msra.mxu0 %v624
      %658 = vmatprep.subr.bf16.mxu0 0
      %659 = vmatpush1.bf16.msra.mxu0 %v625
      %660 = vmatprep.subr.bf16.mxu0 0
      %661 = vmatpush1.bf16.msra.mxu0 %v626
      %662 = vmatprep.subr.bf16.mxu0 0
      %663 = vmatpush1.bf16.msra.mxu0 %v627
      %664 = vmatprep.subr.bf16.mxu0 0
      %665 = vmatpush1.bf16.msra.mxu0 %v628
      %666 = vmatprep.subr.bf16.mxu0 0
      %667 = vmatpush1.bf16.msra.mxu0 %v629
      %668 = vmatprep.subr.bf16.mxu0 0
      %669 = vmatpush1.bf16.msra.mxu0 %v630
      %670 = vmatprep.subr.bf16.mxu0 0
      %671 = vmatpush1.bf16.msra.mxu0 %v631
      %672 = vmatprep.subr.bf16.mxu0 0
      %673 = vmatpush1.bf16.msra.mxu0 %v632
      %674 = vmatprep.subr.bf16.mxu0 0
      %675 = vmatpush1.bf16.msra.mxu0 %v633
      %676 = vmatprep.subr.bf16.mxu0 0
      %677 = vmatpush1.bf16.msra.mxu0 %v634
      %678 = vmatprep.subr.bf16.mxu0 0
      %679 = vmatpush1.bf16.msra.mxu0 %v635
      %680 = vmatprep.subr.bf16.mxu0 0
      %681 = vmatpush1.bf16.msra.mxu0 %v636
      %682 = vmatprep.subr.bf16.mxu0 0
      %683 = vmatpush1.bf16.msra.mxu0 %v637
      %684 = vmatprep.subr.bf16.mxu0 0
      %685 = vmatpush1.bf16.msra.mxu0 %v638
      %686 = vmatprep.subr.bf16.mxu0 0
      %687 = vmatpush1.bf16.msra.mxu0 %v639
      %688 = vmatprep.mubr.bf16.mxu0 %v497
      %689 = vmatmul.mubr.bf16.gmra.mrb[0].mxu0 %v496
      %v690 = vpop.f32.mrb[0].mxu0
      %v691 = vadd.f32 0.0, %v690
      %v692 = vpop.f32.mrb[0].mxu0
      %v693 = vpop.f32.mrb[0].mxu0
      %v694 = vadd.f32 0.0, %v693
      %v695 = vpop.f32.mrb[0].mxu0
      %696 = vmatprep.mubr.bf16.mxu0 %v499
      %697 = vmatmul.mubr.bf16.gmra.mrb[0].mxu0 %v498
      %v698 = vpop.f32.mrb[0].mxu0
      %v699 = vadd.f32 0.0, %v698
      %v700 = vpop.f32.mrb[0].mxu0
      %v701 = vpop.f32.mrb[0].mxu0
      %v702 = vadd.f32 0.0, %v701
      %v703 = vpop.f32.mrb[0].mxu0
      %704 = vmatprep.mubr.bf16.mxu0 %v501
      %705 = vmatmul.mubr.bf16.gmra.mrb[0].mxu0 %v500
      %v706 = vpop.f32.mrb[0].mxu0
      %v707 = vadd.f32 0.0, %v706
      %v708 = vpop.f32.mrb[0].mxu0
      %v709 = vpop.f32.mrb[0].mxu0
      %v710 = vadd.f32 0.0, %v709
      %v711 = vpop.f32.mrb[0].mxu0
      %712 = vmatprep.mubr.bf16.mxu0 %v503
      %713 = vmatmul.mubr.bf16.gmra.mrb[0].mxu0 %v502
      %v714 = vpop.f32.mrb[0].mxu0
      %v715 = vadd.f32 0.0, %v714
      %v716 = vpop.f32.mrb[0].mxu0
      %v717 = vpop.f32.mrb[0].mxu0
      %v718 = vadd.f32 0.0, %v717
      %v719 = vpop.f32.mrb[0].mxu0
      %720 = vmatprep.mubr.bf16.mxu0 %v505
      %721 = vmatmul.mubr.bf16.gmra.mrb[0].mxu0 %v504
      %v722 = vpop.f32.mrb[0].mxu0
      %v723 = vadd.f32 0.0, %v722
      %v724 = vpop.f32.mrb[0].mxu0
      %v725 = vpop.f32.mrb[0].mxu0
      %v726 = vadd.f32 0.0, %v725
      %v727 = vpop.f32.mrb[0].mxu0
      %728 = vmatprep.mubr.bf16.mxu0 %v507
      %729 = vmatmul.mubr.bf16.gmra.mrb[0].mxu0 %v506
      %v730 = vpop.f32.mrb[0].mxu0
      %v731 = vadd.f32 0.0, %v730
      %v732 = vpop.f32.mrb[0].mxu0
      %v733 = vpop.f32.mrb[0].mxu0
      %v734 = vadd.f32 0.0, %v733
      %v735 = vpop.f32.mrb[0].mxu0
      %736 = vmatprep.mubr.bf16.mxu0 %v509
      %737 = vmatmul.mubr.bf16.gmra.mrb[0].mxu0 %v508
      %v738 = vpop.f32.mrb[0].mxu0
      %v739 = vadd.f32 0.0, %v738
      %v740 = vpop.f32.mrb[0].mxu0
      %v741 = vpop.f32.mrb[0].mxu0
      %v742 = vadd.f32 0.0, %v741
      %v743 = vpop.f32.mrb[0].mxu0
      %744 = vmatprep.mubr.bf16.mxu0 %v511
      %745 = vmatmul.mubr.bf16.gmra.mrb[0].mxu0 %v510
      %v746 = vpop.f32.mrb[0].mxu0
      %v747 = vadd.f32 0.0, %v746
      %v748 = vpop.f32.mrb[0].mxu0
      %v749 = vpop.f32.mrb[0].mxu0
      %v750 = vadd.f32 0.0, %v749
      %v751 = vpop.f32.mrb[0].mxu0
      %752 = vmatprep.mubr.bf16.mxu0 %v513
      %753 = vmatmul.mubr.bf16.gmra.mrb[0].mxu0 %v512
      %v754 = vpop.f32.mrb[0].mxu0
      %v755 = vadd.f32 0.0, %v754
      %v756 = vpop.f32.mrb[0].mxu0
      %v757 = vpop.f32.mrb[0].mxu0
      %v758 = vadd.f32 0.0, %v757
      %v759 = vpop.f32.mrb[0].mxu0
      %760 = vmatprep.mubr.bf16.mxu0 %v515
      %761 = vmatmul.mubr.bf16.gmra.mrb[0].mxu0 %v514
      %v762 = vpop.f32.mrb[0].mxu0
      %v763 = vadd.f32 0.0, %v762
      %v764 = vpop.f32.mrb[0].mxu0
      %v765 = vpop.f32.mrb[0].mxu0
      %v766 = vadd.f32 0.0, %v765
      %v767 = vpop.f32.mrb[0].mxu0
      %768 = vmatprep.mubr.bf16.mxu0 %v517
      %769 = vmatmul.mubr.bf16.gmra.mrb[0].mxu0 %v516
      %v770 = vpop.f32.mrb[0].mxu0
      %v771 = vadd.f32 0.0, %v770
      %v772 = vpop.f32.mrb[0].mxu0
      %v773 = vpop.f32.mrb[0].mxu0
      %v774 = vadd.f32 0.0, %v773
      %v775 = vpop.f32.mrb[0].mxu0
      %776 = vmatprep.mubr.bf16.mxu0 %v519
      %777 = vmatmul.mubr.bf16.gmra.mrb[0].mxu0 %v518
      %v778 = vpop.f32.mrb[0].mxu0
      %v779 = vadd.f32 0.0, %v778
      %v780 = vpop.f32.mrb[0].mxu0
      %v781 = vpop.f32.mrb[0].mxu0
      %v782 = vadd.f32 0.0, %v781
      %v783 = vpop.f32.mrb[0].mxu0
      %784 = vmatprep.mubr.bf16.mxu0 %v521
      %785 = vmatmul.mubr.bf16.gmra.mrb[0].mxu0 %v520
      %v786 = vpop.f32.mrb[0].mxu0
      %v787 = vadd.f32 0.0, %v786
      %v788 = vpop.f32.mrb[0].mxu0
      %v789 = vpop.f32.mrb[0].mxu0
      %v790 = vadd.f32 0.0, %v789
      %v791 = vpop.f32.mrb[0].mxu0
      %792 = vmatprep.mubr.bf16.mxu0 %v523
      %793 = vmatmul.mubr.bf16.gmra.mrb[0].mxu0 %v522
      %v794 = vpop.f32.mrb[0].mxu0
      %v795 = vadd.f32 0.0, %v794
      %v796 = vpop.f32.mrb[0].mxu0
      %v797 = vpop.f32.mrb[0].mxu0
      %v798 = vadd.f32 0.0, %v797
      %v799 = vpop.f32.mrb[0].mxu0
      %800 = vmatprep.mubr.bf16.mxu0 %v525
      %801 = vmatmul.mubr.bf16.gmra.mrb[0].mxu0 %v524
      %v802 = vpop.f32.mrb[0].mxu0
      %v803 = vadd.f32 0.0, %v802
      %v804 = vpop.f32.mrb[0].mxu0
      %v805 = vpop.f32.mrb[0].mxu0
      %v806 = vadd.f32 0.0, %v805
      %v807 = vpop.f32.mrb[0].mxu0
      %808 = vmatprep.mubr.bf16.mxu0 %v527
      %809 = vmatmul.mubr.bf16.gmra.mrb[0].mxu0 %v526
      %v810 = vpop.f32.mrb[0].mxu0
      %v811 = vadd.f32 0.0, %v810
      %v812 = vpop.f32.mrb[0].mxu0
      %v813 = vpop.f32.mrb[0].mxu0
      %v814 = vadd.f32 0.0, %v813
      %v815 = vpop.f32.mrb[0].mxu0
      %816 = vdwg.mxu0
      %v817 = vadd.f32 %v304, %v691
      %v818 = vadd.f32 %v305, %v694
      %v819 = vadd.f32 %v306, %v699
      %v820 = vadd.f32 %v307, %v702
      %v821 = vadd.f32 %v308, %v707
      %v822 = vadd.f32 %v309, %v710
      %v823 = vadd.f32 %v310, %v715
      %v824 = vadd.f32 %v311, %v718
      %v825 = vadd.f32 %v312, %v723
      %v826 = vadd.f32 %v313, %v726
      %v827 = vadd.f32 %v314, %v731
      %v828 = vadd.f32 %v315, %v734
      %v829 = vadd.f32 %v316, %v739
      %v830 = vadd.f32 %v317, %v742
      %v831 = vadd.f32 %v318, %v747
      %v832 = vadd.f32 %v319, %v750
      %v833 = vadd.f32 %v320, %v755
      %v834 = vadd.f32 %v321, %v758
      %v835 = vadd.f32 %v322, %v763
      %v836 = vadd.f32 %v323, %v766
      %v837 = vadd.f32 %v324, %v771
      %v838 = vadd.f32 %v325, %v774
      %v839 = vadd.f32 %v326, %v779
      %v840 = vadd.f32 %v327, %v782
      %v841 = vadd.f32 %v328, %v787
      %v842 = vadd.f32 %v329, %v790
      %v843 = vadd.f32 %v330, %v795
      %v844 = vadd.f32 %v331, %v798
      %v845 = vadd.f32 %v332, %v803
      %v846 = vadd.f32 %v333, %v806
      %v847 = vadd.f32 %v334, %v811
      %v848 = vadd.f32 %v335, %v814
      %849 = vst [vmem:[#allocation2] sm:$0xff] %v817
      %850 = vst [vmem:[#allocation2 + $0x8] sm:$0xff] %v818
      %851 = vst [vmem:[#allocation2 + $0x10] sm:$0xff] %v819
      %852 = vst [vmem:[#allocation2 + $0x18] sm:$0xff] %v820
      %853 = vst [vmem:[#allocation2 + $0x20] sm:$0xff] %v821
      %854 = vst [vmem:[#allocation2 + $0x28] sm:$0xff] %v822
      %855 = vst [vmem:[#allocation2 + $0x30] sm:$0xff] %v823
      %856 = vst [vmem:[#allocation2 + $0x38] sm:$0xff] %v824
      %857 = vst [vmem:[#allocation2 + $0x40] sm:$0xff] %v825
      %858 = vst [vmem:[#allocation2 + $0x48] sm:$0xff] %v826
      %859 = vst [vmem:[#allocation2 + $0x50] sm:$0xff] %v827
      %860 = vst [vmem:[#allocation2 + $0x58] sm:$0xff] %v828
      %861 = vst [vmem:[#allocation2 + $0x60] sm:$0xff] %v829
      %862 = vst [vmem:[#allocation2 + $0x68] sm:$0xff] %v830
      %863 = vst [vmem:[#allocation2 + $0x70] sm:$0xff] %v831
      %864 = vst [vmem:[#allocation2 + $0x78] sm:$0xff] %v832
      %865 = vst [vmem:[#allocation2 + $0x80] sm:$0xff] %v833
      %866 = vst [vmem:[#allocation2 + $0x88] sm:$0xff] %v834
      %867 = vst [vmem:[#allocation2 + $0x90] sm:$0xff] %v835
      %868 = vst [vmem:[#allocation2 + $0x98] sm:$0xff] %v836
      %869 = vst [vmem:[#allocation2 + $0xa0] sm:$0xff] %v837
      %870 = vst [vmem:[#allocation2 + $0xa8] sm:$0xff] %v838
      %871 = vst [vmem:[#allocation2 + $0xb0] sm:$0xff] %v839
      %872 = vst [vmem:[#allocation2 + $0xb8] sm:$0xff] %v840
      %873 = vst [vmem:[#allocation2 + $0xc0] sm:$0xff] %v841
      %874 = vst [vmem:[#allocation2 + $0xc8] sm:$0xff] %v842
      %875 = vst [vmem:[#allocation2 + $0xd0] sm:$0xff] %v843
      %876 = vst [vmem:[#allocation2 + $0xd8] sm:$0xff] %v844
      %877 = vst [vmem:[#allocation2 + $0xe0] sm:$0xff] %v845
      %878 = vst [vmem:[#allocation2 + $0xe8] sm:$0xff] %v846
      %879 = vst [vmem:[#allocation2 + $0xf0] sm:$0xff] %v847
      %880 = vst [vmem:[#allocation2 + $0xf8] sm:$0xff] %v848
      // Predicated region
      $region37: #{matmul_bias_act.1} parent=31 // pred_check
        %p881 = pneg %p268
      $region38: #{matmul_bias_act.1} parent=31 // pred_check_branch
        %883 = sbr.rel (%p881) target = $region40
      $region39: #{matmul_bias_act.1} parent=31 // pred_region
        %v884 = vld [vmem:[#allocation2] sm:$0xff]
        %v885 = vld [vmem:[#allocation2 + $0x8] sm:$0xff]
        %v886 = vld [vmem:[#allocation2 + $0x10] sm:$0xff]
        %v887 = vld [vmem:[#allocation2 + $0x18] sm:$0xff]
        %v888 = vld [vmem:[#allocation2 + $0x20] sm:$0xff]
        %v889 = vld [vmem:[#allocation2 + $0x28] sm:$0xff]
        %v890 = vld [vmem:[#allocation2 + $0x30] sm:$0xff]
        %v891 = vld [vmem:[#allocation2 + $0x38] sm:$0xff]
        %v892 = vld [vmem:[#allocation2 + $0x40] sm:$0xff]
        %v893 = vld [vmem:[#allocation2 + $0x48] sm:$0xff]
        %v894 = vld [vmem:[#allocation2 + $0x50] sm:$0xff]
        %v895 = vld [vmem:[#allocation2 + $0x58] sm:$0xff]
        %v896 = vld [vmem:[#allocation2 + $0x60] sm:$0xff]
        %v897 = vld [vmem:[#allocation2 + $0x68] sm:$0xff]
        %v898 = vld [vmem:[#allocation2 + $0x70] sm:$0xff]
        %v899 = vld [vmem:[#allocation2 + $0x78] sm:$0xff]
        %v900 = vld [vmem:[#allocation2 + $0x80] sm:$0xff]
        %v901 = vld [vmem:[#allocation2 + $0x88] sm:$0xff]
        %v902 = vld [vmem:[#allocation2 + $0x90] sm:$0xff]
        %v903 = vld [vmem:[#allocation2 + $0x98] sm:$0xff]
        %v904 = vld [vmem:[#allocation2 + $0xa0] sm:$0xff]
        %v905 = vld [vmem:[#allocation2 + $0xa8] sm:$0xff]
        %v906 = vld [vmem:[#allocation2 + $0xb0] sm:$0xff]
        %v907 = vld [vmem:[#allocation2 + $0xb8] sm:$0xff]
        %v908 = vld [vmem:[#allocation2 + $0xc0] sm:$0xff]
        %v909 = vld [vmem:[#allocation2 + $0xc8] sm:$0xff]
        %v910 = vld [vmem:[#allocation2 + $0xd0] sm:$0xff]
        %v911 = vld [vmem:[#allocation2 + $0xd8] sm:$0xff]
        %v912 = vld [vmem:[#allocation2 + $0xe0] sm:$0xff]
        %v913 = vld [vmem:[#allocation2 + $0xe8] sm:$0xff]
        %v914 = vld [vmem:[#allocation2 + $0xf0] sm:$0xff]
        %v915 = vld [vmem:[#allocation2 + $0xf8] sm:$0xff]
        %v916 = vld [vmem:[%s257] sm:$0x1]
        %v918 = vlaneseq
        %v919 = vshrl.u32 %v918, 7
        %v920 = vsub.s32 0, %v919
        %v921 = vrot.slane %v916, %v920
        %v923 = vadd.f32 %v884, %v921
        %v924 = vadd.f32 %v885, %v921
        %v925 = vadd.f32 %v886, %v921
        %v926 = vadd.f32 %v887, %v921
        %v927 = vadd.f32 %v888, %v921
        %v928 = vadd.f32 %v889, %v921
        %v929 = vadd.f32 %v890, %v921
        %v930 = vadd.f32 %v891, %v921
        %v931 = vadd.f32 %v892, %v921
        %v932 = vadd.f32 %v893, %v921
        %v933 = vadd.f32 %v894, %v921
        %v934 = vadd.f32 %v895, %v921
        %v935 = vadd.f32 %v896, %v921
        %v936 = vadd.f32 %v897, %v921
        %v937 = vadd.f32 %v898, %v921
        %v938 = vadd.f32 %v899, %v921
        %v939 = vadd.f32 %v900, %v921
        %v940 = vadd.f32 %v901, %v921
        %v941 = vadd.f32 %v902, %v921
        %v942 = vadd.f32 %v903, %v921
        %v943 = vadd.f32 %v904, %v921
        %v944 = vadd.f32 %v905, %v921
        %v945 = vadd.f32 %v906, %v921
        %v946 = vadd.f32 %v907, %v921
        %v947 = vadd.f32 %v908, %v921
        %v948 = vadd.f32 %v909, %v921
        %v949 = vadd.f32 %v910, %v921
        %v950 = vadd.f32 %v911, %v921
        %v951 = vadd.f32 %v912, %v921
        %v952 = vadd.f32 %v913, %v921
        %v953 = vadd.f32 %v914, %v921
        %v954 = vadd.f32 %v915, %v921
        %v955 = vmax.f32 %v923, 0.0
        %v956 = vmax.f32 %v924, 0.0
        %v957 = vmax.f32 %v925, 0.0
        %v958 = vmax.f32 %v926, 0.0
        %v959 = vmax.f32 %v927, 0.0
        %v960 = vmax.f32 %v928, 0.0
        %v961 = vmax.f32 %v929, 0.0
        %v962 = vmax.f32 %v930, 0.0
        %v963 = vmax.f32 %v931, 0.0
        %v964 = vmax.f32 %v932, 0.0
        %v965 = vmax.f32 %v933, 0.0
        %v966 = vmax.f32 %v934, 0.0
        %v967 = vmax.f32 %v935, 0.0
        %v968 = vmax.f32 %v936, 0.0
        %v969 = vmax.f32 %v937, 0.0
        %v970 = vmax.f32 %v938, 0.0
        %v971 = vmax.f32 %v939, 0.0
        %v972 = vmax.f32 %v940, 0.0
        %v973 = vmax.f32 %v941, 0.0
        %v974 = vmax.f32 %v942, 0.0
        %v975 = vmax.f32 %v943, 0.0
        %v976 = vmax.f32 %v944, 0.0
        %v977 = vmax.f32 %v945, 0.0
        %v978 = vmax.f32 %v946, 0.0
        %v979 = vmax.f32 %v947, 0.0
        %v980 = vmax.f32 %v948, 0.0
        %v981 = vmax.f32 %v949, 0.0
        %v982 = vmax.f32 %v950, 0.0
        %v983 = vmax.f32 %v951, 0.0
        %v984 = vmax.f32 %v952, 0.0
        %v985 = vmax.f32 %v953, 0.0
        %v986 = vmax.f32 %v954, 0.0
        %v987 = vpack.c.bf16 %v956, %v955
        %v988 = vpack.c.bf16 %v958, %v957
        %v989 = vpack.c.bf16 %v960, %v959
        %v990 = vpack.c.bf16 %v962, %v961
        %v991 = vpack.c.bf16 %v964, %v963
        %v992 = vpack.c.bf16 %v966, %v965
        %v993 = vpack.c.bf16 %v968, %v967
        %v994 = vpack.c.bf16 %v970, %v969
        %v995 = vpack.c.bf16 %v972, %v971
        %v996 = vpack.c.bf16 %v974, %v973
        %v997 = vpack.c.bf16 %v976, %v975
        %v998 = vpack.c.bf16 %v978, %v977
        %v999 = vpack.c.bf16 %v980, %v979
        %v1000 = vpack.c.bf16 %v982, %v981
        %v1001 = vpack.c.bf16 %v984, %v983
        %v1002 = vpack.c.bf16 %v986, %v985
        %v1019 = vunpack.c.l.b16 %v987
        %v1020 = vunpack.c.h.b16 %v987
        %v1021 = vunpack.c.l.b16 %v988
        %v1022 = vunpack.c.h.b16 %v988
        %v1023 = vunpack.c.l.b16 %v989
        %v1024 = vunpack.c.h.b16 %v989
        %v1025 = vunpack.c.l.b16 %v990
        %v1026 = vunpack.c.h.b16 %v990
        %v1027 = vunpack.c.l.b16 %v991
        %v1028 = vunpack.c.h.b16 %v991
        %v1029 = vunpack.c.l.b16 %v992
        %v1030 = vunpack.c.h.b16 %v992
        %v1031 = vunpack.c.l.b16 %v993
        %v1032 = vunpack.c.h.b16 %v993
        %v1033 = vunpack.c.l.b16 %v994
        %v1034 = vunpack.c.h.b16 %v994
        %v1035 = vunpack.c.l.b16 %v995
        %v1036 = vunpack.c.h.b16 %v995
        %v1037 = vunpack.c.l.b16 %v996
        %v1038 = vunpack.c.h.b16 %v996
        %v1039 = vunpack.c.l.b16 %v997
        %v1040 = vunpack.c.h.b16 %v997
        %v1041 = vunpack.c.l.b16 %v998
        %v1042 = vunpack.c.h.b16 %v998
        %v1043 = vunpack.c.l.b16 %v999
        %v1044 = vunpack.c.h.b16 %v999
        %v1045 = vunpack.c.l.b16 %v1000
        %v1046 = vunpack.c.h.b16 %v1000
        %v1047 = vunpack.c.l.b16 %v1001
        %v1048 = vunpack.c.h.b16 %v1001
        %v1049 = vunpack.c.l.b16 %v1002
        %v1050 = vunpack.c.h.b16 %v1002
        %v1051 = vpack.c.b16 %v1019, %v1019
        %v1052 = vpack.c.b16 %v1020, %v1020
        %v1053 = vpack.c.b16 %v1021, %v1021
        %v1054 = vpack.c.b16 %v1022, %v1022
        %v1055 = vpack.c.b16 %v1023, %v1023
        %v1056 = vpack.c.b16 %v1024, %v1024
        %v1057 = vpack.c.b16 %v1025, %v1025
        %v1058 = vpack.c.b16 %v1026, %v1026
        %v1059 = vpack.c.b16 %v1027, %v1027
        %v1060 = vpack.c.b16 %v1028, %v1028
        %v1061 = vpack.c.b16 %v1029, %v1029
        %v1062 = vpack.c.b16 %v1030, %v1030
        %v1063 = vpack.c.b16 %v1031, %v1031
        %v1064 = vpack.c.b16 %v1032, %v1032
        %v1065 = vpack.c.b16 %v1033, %v1033
        %v1066 = vpack.c.b16 %v1034, %v1034
        %v1067 = vpack.c.b16 %v1035, %v1035
        %v1068 = vpack.c.b16 %v1036, %v1036
        %v1069 = vpack.c.b16 %v1037, %v1037
        %v1070 = vpack.c.b16 %v1038, %v1038
        %v1071 = vpack.c.b16 %v1039, %v1039
        %v1072 = vpack.c.b16 %v1040, %v1040
        %v1073 = vpack.c.b16 %v1041, %v1041
        %v1074 = vpack.c.b16 %v1042, %v1042
        %v1075 = vpack.c.b16 %v1043, %v1043
        %v1076 = vpack.c.b16 %v1044, %v1044
        %v1077 = vpack.c.b16 %v1045, %v1045
        %v1078 = vpack.c.b16 %v1046, %v1046
        %v1079 = vpack.c.b16 %v1047, %v1047
        %v1080 = vpack.c.b16 %v1048, %v1048
        %v1081 = vpack.c.b16 %v1049, %v1049
        %v1082 = vpack.c.b16 %v1050, %v1050
        %1115 = vst [vmem:[%s265] sm:$0xf] %v1051
        %1116 = vst [vmem:[%s265 + $0x4] sm:$0xf] %v1052
        %1117 = vst [vmem:[%s265 + $0x8] sm:$0xf] %v1053
        %1118 = vst [vmem:[%s265 + $0xc] sm:$0xf] %v1054
        %1119 = vst [vmem:[%s265 + $0x10] sm:$0xf] %v1055
        %1120 = vst [vmem:[%s265 + $0x14] sm:$0xf] %v1056
        %1121 = vst [vmem:[%s265 + $0x18] sm:$0xf] %v1057
        %1122 = vst [vmem:[%s265 + $0x1c] sm:$0xf] %v1058
        %1123 = vst [vmem:[%s265 + $0x20] sm:$0xf] %v1059
        %1124 = vst [vmem:[%s265 + $0x24] sm:$0xf] %v1060
        %1125 = vst [vmem:[%s265 + $0x28] sm:$0xf] %v1061
        %1126 = vst [vmem:[%s265 + $0x2c] sm:$0xf] %v1062
        %1127 = vst [vmem:[%s265 + $0x30] sm:$0xf] %v1063
        %1128 = vst [vmem:[%s265 + $0x34] sm:$0xf] %v1064
        %1129 = vst [vmem:[%s265 + $0x38] sm:$0xf] %v1065
        %1130 = vst [vmem:[%s265 + $0x3c] sm:$0xf] %v1066
        %1131 = vst [vmem:[%s265 + $0x40] sm:$0xf] %v1067
        %1132 = vst [vmem:[%s265 + $0x44] sm:$0xf] %v1068
        %1133 = vst [vmem:[%s265 + $0x48] sm:$0xf] %v1069
        %1134 = vst [vmem:[%s265 + $0x4c] sm:$0xf] %v1070
        %1135 = vst [vmem:[%s265 + $0x50] sm:$0xf] %v1071
        %1136 = vst [vmem:[%s265 + $0x54] sm:$0xf] %v1072
        %1137 = vst [vmem:[%s265 + $0x58] sm:$0xf] %v1073
        %1138 = vst [vmem:[%s265 + $0x5c] sm:$0xf] %v1074
        %1139 = vst [vmem:[%s265 + $0x60] sm:$0xf] %v1075
        %1140 = vst [vmem:[%s265 + $0x64] sm:$0xf] %v1076
        %1141 = vst [vmem:[%s265 + $0x68] sm:$0xf] %v1077
        %1142 = vst [vmem:[%s265 + $0x6c] sm:$0xf] %v1078
        %1143 = vst [vmem:[%s265 + $0x70] sm:$0xf] %v1079
        %1144 = vst [vmem:[%s265 + $0x74] sm:$0xf] %v1080
        %1145 = vst [vmem:[%s265 + $0x78] sm:$0xf] %v1081
        %1146 = vst [vmem:[%s265 + $0x7c] sm:$0xf] %v1082
      $region40: #{matmul_bias_act.1} parent=31 // pred_fallthru
        _
      %s1147 = smul.u32 32, %s19
      %p1148 = scmp.lt.s32.totalorder %s1147, 511
      %s1149 = scalar_select %p1148, %s1147, 511
      %p1150 = scmp.lt.s32.totalorder %s20, 0
      %s1151 = scalar_select %p1150, %s20, 0
      %s1152 = sadd.s32 %s1151, %s1149
      %s1153 = smul.addr %s1152, 4
      %s1154 = scalar_lea.vmem %s3, %s1153
      // Predicated region
      $region41: #{matmul_bias_act.1} parent=31 // pred_check
        %p1155 = pneg %p135
      $region42: #{matmul_bias_act.1} parent=31 // pred_check_branch
        %1157 = sbr.rel (%p1155) target = $region44
      $region43: #{matmul_bias_act.1} parent=31 // pred_region
        %s1158 = smul.u32 32, %s19
      $region44: #{matmul_bias_act.1} parent=31 // pred_fallthru
        _
    $region32: #{matmul_bias_act.1} parent=5 // pred_fallthru
      _
    %p1159 = scmp.le.s32.totalorder 2, %s9
    // Predicated region
    $region45: #{matmul_bias_act.1} parent=5 // pred_check
      %p1160 = pneg %p1159
    $region46: #{matmul_bias_act.1} parent=5 // pred_check_branch
      %1162 = sbr.rel (%p1160) target = $region48
    $region47: #{matmul_bias_act.1} parent=5 // pred_region
      %s1163 = ssub.s32 %s9, 2
      // Predicated region
      $region49: #{matmul_bias_act.1} parent=47 // pred_check
        %p1164 = pneg %p141
      $region50: #{matmul_bias_act.1} parent=47 // pred_check_branch
        %1166 = sbr.rel (%p1164) target = $region52
      $region51: #{matmul_bias_act.1} parent=47 // pred_region
        %s1167 = smul.u32 32, %s22
        %p1168 = scmp.lt.s32.totalorder %s1167, 511
        %s1169 = scalar_select %p1168, %s1167, 511
        %p1170 = scmp.lt.s32.totalorder %s23, 0
        %s1171 = scalar_select %p1170, %s23, 0
        %s1172 = sadd.s32 %s1171, %s1169
        %s1173 = smul.addr %s1172, 4
        %s1174 = scalar_lea.vmem %s3, %s1173
      $region52: #{matmul_bias_act.1} parent=47 // pred_fallthru
        _
    $region48: #{matmul_bias_act.1} parent=5 // pred_fallthru
      _
  $region6: #{matmul_bias_act.1} parent=0 // loop_footer
    %s13 = sadd.s32 1, %s9
  $region7: #{matmul_bias_act.1} parent=0 // loop_footer_branch
    %8 = sbr.rel target = $region3
  $region8: #{matmul_bias_act.1} parent=0 // loop_exit
    _

</llo_original>
